<compile_context>
chip_gen: v5e
topology: v5e:2x2
jax: 0.10.0
libtpu: 0.0.40
codegen_flags: <defaults>
</compile_context>

<pallas_src>
import functools

import jax
import jax.numpy as jnp
from jax import lax
from jax.experimental import pallas as pl
from jax.experimental.pallas import tpu as pltpu

BN_EPS = 1e-5
TM_CAP = 2048     # lane-axis tile cap; multiple of 256 (full MXU width)
TM_MIN = 512      # don't shrink below this when chasing GM >= 4


def _round_up(x, m):
    return (x + m - 1) // m * m


def _choose_tm(mr):
    """Lane-axis tile: as large as possible (amortize the ~0.35us per-grid-step
    overhead), but keep >= 4 grid steps (2 TensorCores x 2-deep pipeline on
    v7x) when that does not shrink the tile below TM_MIN."""
    if mr <= TM_CAP:
        return mr                      # whole problem in one (or few) tiles
    tm = TM_CAP
    while tm > TM_MIN and (mr + tm - 1) // tm < 4:
        tm //= 2
    return tm


# ---------------------------------------------------------------------------
# Pass A: conv-as-matmul (bf16 in, f32 acc) + per-tile BN partial statistics.
#   w_ref:   (C_sub, Kp)       bf16   (full weight, resident)
#   x_ref:   (Kp, TM)          bf16   (im2col^T tile, lane axis = M)
#   y_ref:   (C_sub, TM)       bf16   conv output tile (lane-dense store)
#   sum_ref: (1, C_sub, 128)   f32    per-tile channel partial sums
#   ssq_ref: (1, C_sub, 128)   f32    per-tile channel partial sums-of-squares
# ---------------------------------------------------------------------------
def _conv_stats_kernel(w_ref, x_ref, y_ref, sum_ref, ssq_ref):
    acc = jnp.dot(w_ref[...], x_ref[...], preferred_element_type=jnp.float32)
    y_ref[...] = acc.astype(y_ref.dtype)
    # Lane-dense BN partials from the f32 accumulator: fold TM down to
    # 128-lane partials with static, vreg-aligned lane slices (pure VPU adds;
    # no cross-lane reduce, no 1-lane masked stores).  Cross-tile finish is
    # done in plain JAX on tiny arrays.
    n_chunks = acc.shape[1] // 128
    ps = acc[:, 0:128]
    pq = ps * ps
    for j in range(1, n_chunks):
        c = acc[:, j * 128:(j + 1) * 128]
        ps = ps + c
        pq = pq + c * c
    sum_ref[...] = ps[None]
    ssq_ref[...] = pq[None]


# ---------------------------------------------------------------------------
# Pass B: y * scale + bias (+ residual) -> ReLU.  scale/bias are per-channel
# f32 with gamma*rsqrt(var+eps) / beta - mean*scale pre-folded in the wrapper.
# Output aliases the y buffer (same shape/dtype).
# ---------------------------------------------------------------------------
def _bn_relu_kernel(y_ref, s_ref, b_ref, o_ref):
    y = y_ref[...].astype(jnp.float32) * s_ref[...] + b_ref[...]
    o_ref[...] = jnp.maximum(y, 0.0).astype(o_ref.dtype)


def _bn_res_relu_kernel(y_ref, s_ref, b_ref, r_ref, o_ref):
    y = (y_ref[...].astype(jnp.float32) * s_ref[...] + b_ref[...]
         + r_ref[...].astype(jnp.float32))
    o_ref[...] = jnp.maximum(y, 0.0).astype(o_ref.dtype)


# ---------------------------------------------------------------------------
# Plain-JAX glue: channel-first im2col (bf16) and weight reshape.
# ---------------------------------------------------------------------------
def _im2col_cf(x_cnhw, stride):
    """3x3 / pad 1 patches from a channel-first (C, N, H, W) activation.
    Returns ((9*C, N*Ho*Wo), Ho, Wo); row order (kh, kw, c), column order
    (n, ho, wo) -- matching the (C, M) layout of the conv outputs so the
    second conv consumes the first conv's output with no relayout."""
    C, N, H, W = x_cnhw.shape
    xp = jnp.pad(x_cnhw, ((0, 0), (0, 0), (1, 1), (1, 1)))
    Ho = (H + 2 - 3) // stride + 1
    Wo = (W + 2 - 3) // stride + 1
    patches = [xp[:, :, kh:kh + stride * Ho:stride, kw:kw + stride * Wo:stride]
               for kh in range(3) for kw in range(3)]
    cols = jnp.stack(patches, axis=0)                  # (9, C, N, Ho, Wo)
    return cols.reshape(9 * C, N * Ho * Wo), Ho, Wo


def _reshape_weight_T(w_oihw):
    """(Cout, Cin, 3, 3) -> (Cout, 9*Cin), column order (kh, kw, cin)."""
    Cout, Cin, _, _ = w_oihw.shape
    return jnp.transpose(w_oihw, (0, 2, 3, 1)).reshape(Cout, 9 * Cin)


# ---------------------------------------------------------------------------
# One conv3x3 + train-mode BN + (optional residual) + ReLU.
# x_cf: (Cin, N, H, W) bf16.  Returns ((C_sub, Mp) bf16, Ho, Wo, M).
# ---------------------------------------------------------------------------
def _conv_bn_relu(x_cf, w_oihw, gamma, beta, stride, residual_cm=None):
    Cout = w_oihw.shape[0]

    # TODO(synk): fuse this im2col into pass A (see module header).
    xT, Ho, Wo = _im2col_cf(x_cf, stride)              # (9*Cin, M) bf16
    K, M = xT.shape

    Kp = _round_up(K, 16)                 # bf16 packs 2 rows per sublane
    C_sub = _round_up(Cout, 8)            # sublane-aligned channel count
    Mr = _round_up(M, 128)
    TM = _choose_tm(Mr)                   # lane-axis tile (multiple of 128)
    Mp = _round_up(Mr, TM)
    GM = Mp // TM

    xT_b = jnp.pad(xT, ((0, Kp - K), (0, Mp - M)))                 # bf16
    wT_b = jnp.pad(_reshape_weight_T(w_oihw).astype(jnp.bfloat16),
                   ((0, C_sub - Cout), (0, Kp - K)))               # bf16

    cparams = pltpu.CompilerParams(dimension_semantics=("parallel",))

    # ---- Pass A: matmul + per-tile BN partial statistics -------------------
    y, psum, pssq = pl.pallas_call(
        _conv_stats_kernel,
        out_shape=(jax.ShapeDtypeStruct((C_sub, Mp), jnp.bfloat16),
                   jax.ShapeDtypeStruct((GM, C_sub, 128), jnp.float32),
                   jax.ShapeDtypeStruct((GM, C_sub, 128), jnp.float32)),
        grid=(GM,),
        in_specs=[pl.BlockSpec((C_sub, Kp), lambda i: (0, 0)),
                  pl.BlockSpec((Kp, TM), lambda i: (0, i))],
        out_specs=[pl.BlockSpec((C_sub, TM), lambda i: (0, i)),
                   pl.BlockSpec((1, C_sub, 128), lambda i: (i, 0, 0)),
                   pl.BlockSpec((1, C_sub, 128), lambda i: (i, 0, 0))],
        compiler_params=cparams,
    )(wT_b, xT_b)

    # ---- Tiny cross-tile reduction + BN fold (train-mode biased stats) -----
    # Padded M columns / padded channels are exactly zero so they do not
    # perturb the sums; mean/var use the true M.
    tot = jnp.sum(psum, axis=(0, 2))                   # (C_sub,)
    tot_sq = jnp.sum(pssq, axis=(0, 2))
    mean = tot / M
    var = jnp.maximum(tot_sq / M - mean * mean, 0.0)   # clamp E[x^2]-m^2
    g = jnp.pad(gamma.astype(jnp.float32), (0, C_sub - Cout))
    b = jnp.pad(beta.astype(jnp.float32), (0, C_sub - Cout))
    scale_c = g * lax.rsqrt(var + BN_EPS)
    scale = scale_c.reshape(C_sub, 1)
    bias = (b - mean * scale_c).reshape(C_sub, 1)

    # ---- Pass B: fused scale/bias (+ residual) + ReLU, aliased onto y ------
    if residual_cm is None:
        out = pl.pallas_call(
            _bn_relu_kernel,
            out_shape=jax.ShapeDtypeStruct((C_sub, Mp), jnp.bfloat16),
            grid=(GM,),
            in_specs=[pl.BlockSpec((C_sub, TM), lambda i: (0, i)),
                      pl.BlockSpec((C_sub, 1), lambda i: (0, 0)),
                      pl.BlockSpec((C_sub, 1), lambda i: (0, 0))],
            out_specs=pl.BlockSpec((C_sub, TM), lambda i: (0, i)),
            input_output_aliases={0: 0},
            compiler_params=cparams,
        )(y, scale, bias)
    else:
        res = jnp.pad(residual_cm.astype(jnp.bfloat16),
                      ((0, C_sub - residual_cm.shape[0]),
                       (0, Mp - residual_cm.shape[1])))
        out = pl.pallas_call(
            _bn_res_relu_kernel,
            out_shape=jax.ShapeDtypeStruct((C_sub, Mp), jnp.bfloat16),
            grid=(GM,),
            in_specs=[pl.BlockSpec((C_sub, TM), lambda i: (0, i)),
                      pl.BlockSpec((C_sub, 1), lambda i: (0, 0)),
                      pl.BlockSpec((C_sub, 1), lambda i: (0, 0)),
                      pl.BlockSpec((C_sub, TM), lambda i: (0, i))],
            out_specs=pl.BlockSpec((C_sub, TM), lambda i: (0, i)),
            input_output_aliases={0: 0},
            compiler_params=cparams,
        )(y, scale, bias, res)

    return out, Ho, Wo, M


# ---------------------------------------------------------------------------
# Full ResBasicBlock forward (NCHW in / NCHW out, matching the PyTorch module).
# ---------------------------------------------------------------------------
@functools.partial(jax.jit, static_argnums=(2,))
def res_basic_block(x_nchw, params, stride):
    planes = params["w1"].shape[0]
    N, Cin, H, W = x_nchw.shape

    # Channels-first bf16 working layout, kept across both convs.
    x_cf = jnp.transpose(x_nchw.astype(jnp.bfloat16), (1, 0, 2, 3))

    # conv1 -> bn1 -> relu1  (no residual stream at all)
    y1_cm, Ho, Wo, M1 = _conv_bn_relu(
        x_cf, params["w1"], params["g1"], params["b1"], stride)
    # TODO(synk): keep this activation resident in VMEM across the two convs.
    y1_cf = y1_cm[:planes, :M1].reshape(planes, N, Ho, Wo)   # channel-first

    # shortcut (DownsampleA: AvgPool2d(k=1, stride) == strided subsample,
    # then zero-pad channels), built directly in the (C, M) kernel layout.
    if stride != 1 or Cin != planes:
        s_cf = x_cf[:, :, ::stride, ::stride]        # (Cin, N, Ho, Wo)
    else:
        s_cf = x_cf
    res_cm = s_cf.reshape(s_cf.shape[0], -1)         # channel zero-fill comes
                                                     # from the C_sub pad below

    # conv2 -> bn2 (+ shortcut) -> relu2
    y2_cm, Ho2, Wo2, M2 = _conv_bn_relu(
        y1_cf, params["w2"], params["g2"], params["b2"], 1,
        residual_cm=res_cm)

    out = y2_cm[:planes, :M2].reshape(planes, N, Ho2, Wo2)
    return jnp.transpose(out, (1, 0, 2, 3)).astype(jnp.float32)   # NCHW f32


# ---------------------------------------------------------------------------
# Pure-JAX f32 reference (PyTorch train-mode semantics) for the check.
# ---------------------------------------------------------------------------
def _ref_block(x_nchw, params, stride):
    dn = ("NCHW", "OIHW", "NCHW")

    def conv(x, w, s):
        return lax.conv_general_dilated(x, w, (s, s), ((1, 1), (1, 1)),
                                        dimension_numbers=dn)

    def bn(x, g, b):
        mean = x.mean(axis=(0, 2, 3), keepdims=True)
        var = ((x - mean) ** 2).mean(axis=(0, 2, 3), keepdims=True)
        xhat = (x - mean) * lax.rsqrt(var + BN_EPS)
        return xhat * g.reshape(1, -1, 1, 1) + b.reshape(1, -1, 1, 1)

    out = jax.nn.relu(bn(conv(x_nchw, params["w1"], stride),
                         params["g1"], params["b1"]))
    out = bn(conv(out, params["w2"], 1), params["g2"], params["b2"])
    Cin = x_nchw.shape[1]
    planes = params["w1"].shape[0]
    if stride != 1 or Cin != planes:
        s = x_nchw[:, :, ::stride, ::stride]
        if planes > Cin:
            s = jnp.pad(s, ((0, 0), (0, planes - Cin), (0, 0), (0, 0)))
    else:
        s = x_nchw
    return jax.nn.relu(out + s)


if __name__ == "__main__":
    # ResBasicBlock(inplanes=4, planes=8, stride=2) on a small input.
    N, Cin, H, W = 2, 4, 16, 16
    planes, stride = 8, 2

    key = jax.random.PRNGKey(0)
    kx, kw1, kw2 = jax.random.split(key, 3)
    x = jax.random.normal(kx, (N, Cin, H, W), jnp.float32)

    params = {
        "w1": 0.1 * jax.random.normal(kw1, (planes, Cin, 3, 3), jnp.float32),
        "g1": jnp.ones((planes,), jnp.float32),
        "b1": jnp.zeros((planes,), jnp.float32),
        "w2": 0.1 * jax.random.normal(kw2, (planes, planes, 3, 3), jnp.float32),
        "g2": jnp.ones((planes,), jnp.float32),
        "b2": jnp.zeros((planes,), jnp.float32),
    }

    out = res_basic_block(x, params, stride)
    out = jax.block_until_ready(out)

    ref = _ref_block(x, params, stride)
    assert out.shape == (N, planes, H // stride, W // stride), out.shape
    # Tolerance reflects bf16 MXU inputs / bf16 off-chip intermediates
    # (f32 accumulation + f32 BN statistics) vs an f32 reference; any
    # structural/indexing bug would produce O(1) errors.
    assert jnp.allclose(out, ref, atol=5e-2, rtol=5e-2), (
        float(jnp.max(jnp.abs(out - ref))))

    print("KERNEL_OK")
</pallas_src>

<mosaic_0001>
module attributes {stable_mosaic.version = 11 : i64} {
  func.func @_conv_stats_kernel(%arg0: i32, %arg1: memref<8x48xbf16, #tpu.memory_space<vmem>>, %arg2: memref<48x128xbf16, #tpu.memory_space<vmem>>, %arg3: memref<8x128xbf16, #tpu.memory_space<vmem>>, %arg4: memref<1x8x128xf32, #tpu.memory_space<vmem>>, %arg5: memref<1x8x128xf32, #tpu.memory_space<vmem>>) attributes {dimension_semantics = [#tpu.dimension_semantics<parallel>], iteration_bounds = array<i64: 1>, scalar_prefetch = 0 : i64, scratch_operands = 0 : i64, tpu.core_type = #tpu.core_type<tc>, window_params = [{pipeline_mode = #tpu.pipeline_mode<synchronous>, transform_indices = @transform_0, window_bounds = array<i64: 8, 48>}, {transform_indices = @transform_1, window_bounds = array<i64: 48, 128>}, {transform_indices = @transform_2, window_bounds = array<i64: 8, 128>}, {transform_indices = @transform_3, window_bounds = array<i64: 1, 8, 128>}, {transform_indices = @transform_4, window_bounds = array<i64: 1, 8, 128>}]} {
    %c0 = arith.constant 0 : index
    %c0_0 = arith.constant 0 : index
    %0 = vector.load %arg1[%c0, %c0_0] : memref<8x48xbf16, #tpu.memory_space<vmem>>, vector<8x48xbf16>
    %c0_1 = arith.constant 0 : index
    %c0_2 = arith.constant 0 : index
    %1 = vector.load %arg2[%c0_1, %c0_2] : memref<48x128xbf16, #tpu.memory_space<vmem>>, vector<48x128xbf16>
    %cst = arith.constant dense<0.000000e+00> : vector<8x128xf32>
    %2 = tpu.matmul %0, %1, %cst {dimension_numbers = #tpu.dot_dimension_numbers<[1], [0], [0], [1], [0, 0, 1, 1], [], []>} : vector<8x48xbf16>, vector<48x128xbf16>, vector<8x128xf32> -> vector<8x128xf32>
    %3 = arith.truncf %2 : vector<8x128xf32> to vector<8x128xbf16>
    %c0_3 = arith.constant 0 : index
    %c0_4 = arith.constant 0 : index
    %4 = vector.load %arg3[%c0_3, %c0_4] : memref<8x128xbf16, #tpu.memory_space<vmem>>, vector<8x128xbf16>
    tpu.vector_store %arg3[%c0_3, %c0_4], %3 {strides = array<i32>} : memref<8x128xbf16, #tpu.memory_space<vmem>>, vector<8x128xbf16>,
    %5 = arith.mulf %2, %2 : vector<8x128xf32>
    %6 = vector.shape_cast %2 : vector<8x128xf32> to vector<1x8x128xf32>
    %c0_5 = arith.constant 0 : index
    %c0_6 = arith.constant 0 : index
    %c0_7 = arith.constant 0 : index
    %7 = vector.load %arg4[%c0_5, %c0_6, %c0_7] : memref<1x8x128xf32, #tpu.memory_space<vmem>>, vector<1x8x128xf32>
    tpu.vector_store %arg4[%c0_5, %c0_6, %c0_7], %6 {strides = array<i32>} : memref<1x8x128xf32, #tpu.memory_space<vmem>>, vector<1x8x128xf32>,
    %8 = vector.shape_cast %5 : vector<8x128xf32> to vector<1x8x128xf32>
    %c0_8 = arith.constant 0 : index
    %c0_9 = arith.constant 0 : index
    %c0_10 = arith.constant 0 : index
    %9 = vector.load %arg5[%c0_8, %c0_9, %c0_10] : memref<1x8x128xf32, #tpu.memory_space<vmem>>, vector<1x8x128xf32>
    tpu.vector_store %arg5[%c0_8, %c0_9, %c0_10], %8 {strides = array<i32>} : memref<1x8x128xf32, #tpu.memory_space<vmem>>, vector<1x8x128xf32>,
    return
  }
  func.func @transform_0(%arg0: i32) -> (i32, i32) {
    %c0_i32 = arith.constant 0 : i32
    %c0_i32_0 = arith.constant 0 : i32
    %c0_i32_1 = arith.constant 0 : i32
    return %c0_i32, %c0_i32_0 : i32, i32
  }
  func.func @transform_1(%arg0: i32) -> (i32, i32) {
    %c0_i32 = arith.constant 0 : i32
    %c0_i32_0 = arith.constant 0 : i32
    return %c0_i32, %arg0 : i32, i32
  }
  func.func @transform_2(%arg0: i32) -> (i32, i32) {
    %c0_i32 = arith.constant 0 : i32
    %c0_i32_0 = arith.constant 0 : i32
    return %c0_i32, %arg0 : i32, i32
  }
  func.func @transform_3(%arg0: i32) -> (i32, i32, i32) {
    %c0_i32 = arith.constant 0 : i32
    %c0_i32_0 = arith.constant 0 : i32
    %c0_i32_1 = arith.constant 0 : i32
    return %arg0, %c0_i32, %c0_i32_0 : i32, i32, i32
  }
  func.func @transform_4(%arg0: i32) -> (i32, i32, i32) {
    %c0_i32 = arith.constant 0 : i32
    %c0_i32_0 = arith.constant 0 : i32
    %c0_i32_1 = arith.constant 0 : i32
    return %arg0, %c0_i32, %c0_i32_0 : i32, i32, i32
  }
}

module attributes {stable_mosaic.version = 11 : i64} {
  func.func @_bn_relu_kernel(%arg0: i32, %arg1: memref<8x128xbf16, #tpu.memory_space<vmem>>, %arg2: memref<8x1xf32, #tpu.memory_space<vmem>>, %arg3: memref<8x1xf32, #tpu.memory_space<vmem>>, %arg4: memref<8x128xbf16, #tpu.memory_space<vmem>>) attributes {dimension_semantics = [#tpu.dimension_semantics<parallel>], iteration_bounds = array<i64: 1>, scalar_prefetch = 0 : i64, scratch_operands = 0 : i64, tpu.core_type = #tpu.core_type<tc>, window_params = [{transform_indices = @transform_0, window_bounds = array<i64: 8, 128>}, {pipeline_mode = #tpu.pipeline_mode<synchronous>, transform_indices = @transform_1, window_bounds = array<i64: 8, 1>}, {pipeline_mode = #tpu.pipeline_mode<synchronous>, transform_indices = @transform_2, window_bounds = array<i64: 8, 1>}, {transform_indices = @transform_3, window_bounds = array<i64: 8, 128>}]} {
    %c0 = arith.constant 0 : index
    %c0_0 = arith.constant 0 : index
    %0 = vector.load %arg1[%c0, %c0_0] : memref<8x128xbf16, #tpu.memory_space<vmem>>, vector<8x128xbf16>
    %1 = arith.extf %0 : vector<8x128xbf16> to vector<8x128xf32>
    %c0_1 = arith.constant 0 : index
    %c0_2 = arith.constant 0 : index
    %2 = vector.load %arg2[%c0_1, %c0_2] : memref<8x1xf32, #tpu.memory_space<vmem>>, vector<8x1xf32>
    %3 = vector.broadcast %2 : vector<8x1xf32> to vector<8x128xf32>
    %4 = arith.mulf %1, %3 : vector<8x128xf32>
    %c0_3 = arith.constant 0 : index
    %c0_4 = arith.constant 0 : index
    %5 = vector.load %arg3[%c0_3, %c0_4] : memref<8x1xf32, #tpu.memory_space<vmem>>, vector<8x1xf32>
    %6 = vector.broadcast %5 : vector<8x1xf32> to vector<8x128xf32>
    %7 = arith.addf %4, %6 : vector<8x128xf32>
    %cst = arith.constant 0.000000e+00 : f32
    %8 = vector.broadcast %cst : f32 to vector<8x128xf32>
    %9 = arith.maximumf %7, %8 : vector<8x128xf32>
    %10 = arith.truncf %9 : vector<8x128xf32> to vector<8x128xbf16>
    %c0_5 = arith.constant 0 : index
    %c0_6 = arith.constant 0 : index
    %11 = vector.load %arg4[%c0_5, %c0_6] : memref<8x128xbf16, #tpu.memory_space<vmem>>, vector<8x128xbf16>
    tpu.vector_store %arg4[%c0_5, %c0_6], %10 {strides = array<i32>} : memref<8x128xbf16, #tpu.memory_space<vmem>>, vector<8x128xbf16>,
    return
  }
  func.func @transform_0(%arg0: i32) -> (i32, i32) {
    %c0_i32 = arith.constant 0 : i32
    %c0_i32_0 = arith.constant 0 : i32
    return %c0_i32, %arg0 : i32, i32
  }
  func.func @transform_1(%arg0: i32) -> (i32, i32) {
    %c0_i32 = arith.constant 0 : i32
    %c0_i32_0 = arith.constant 0 : i32
    %c0_i32_1 = arith.constant 0 : i32
    return %c0_i32, %c0_i32_0 : i32, i32
  }
  func.func @transform_2(%arg0: i32) -> (i32, i32) {
    %c0_i32 = arith.constant 0 : i32
    %c0_i32_0 = arith.constant 0 : i32
    %c0_i32_1 = arith.constant 0 : i32
    return %c0_i32, %c0_i32_0 : i32, i32
  }
  func.func @transform_3(%arg0: i32) -> (i32, i32) {
    %c0_i32 = arith.constant 0 : i32
    %c0_i32_0 = arith.constant 0 : i32
    return %c0_i32, %arg0 : i32, i32
  }
}

module attributes {stable_mosaic.version = 11 : i64} {
  func.func @_conv_stats_kernel(%arg0: i32, %arg1: memref<8x80xbf16, #tpu.memory_space<vmem>>, %arg2: memref<80x128xbf16, #tpu.memory_space<vmem>>, %arg3: memref<8x128xbf16, #tpu.memory_space<vmem>>, %arg4: memref<1x8x128xf32, #tpu.memory_space<vmem>>, %arg5: memref<1x8x128xf32, #tpu.memory_space<vmem>>) attributes {dimension_semantics = [#tpu.dimension_semantics<parallel>], iteration_bounds = array<i64: 1>, scalar_prefetch = 0 : i64, scratch_operands = 0 : i64, tpu.core_type = #tpu.core_type<tc>, window_params = [{pipeline_mode = #tpu.pipeline_mode<synchronous>, transform_indices = @transform_0, window_bounds = array<i64: 8, 80>}, {transform_indices = @transform_1, window_bounds = array<i64: 80, 128>}, {transform_indices = @transform_2, window_bounds = array<i64: 8, 128>}, {transform_indices = @transform_3, window_bounds = array<i64: 1, 8, 128>}, {transform_indices = @transform_4, window_bounds = array<i64: 1, 8, 128>}]} {
    %c0 = arith.constant 0 : index
    %c0_0 = arith.constant 0 : index
    %0 = vector.load %arg1[%c0, %c0_0] : memref<8x80xbf16, #tpu.memory_space<vmem>>, vector<8x80xbf16>
    %c0_1 = arith.constant 0 : index
    %c0_2 = arith.constant 0 : index
    %1 = vector.load %arg2[%c0_1, %c0_2] : memref<80x128xbf16, #tpu.memory_space<vmem>>, vector<80x128xbf16>
    %cst = arith.constant dense<0.000000e+00> : vector<8x128xf32>
    %2 = tpu.matmul %0, %1, %cst {dimension_numbers = #tpu.dot_dimension_numbers<[1], [0], [0], [1], [0, 0, 1, 1], [], []>} : vector<8x80xbf16>, vector<80x128xbf16>, vector<8x128xf32> -> vector<8x128xf32>
    %3 = arith.truncf %2 : vector<8x128xf32> to vector<8x128xbf16>
    %c0_3 = arith.constant 0 : index
    %c0_4 = arith.constant 0 : index
    %4 = vector.load %arg3[%c0_3, %c0_4] : memref<8x128xbf16, #tpu.memory_space<vmem>>, vector<8x128xbf16>
    tpu.vector_store %arg3[%c0_3, %c0_4], %3 {strides = array<i32>} : memref<8x128xbf16, #tpu.memory_space<vmem>>, vector<8x128xbf16>,
    %5 = arith.mulf %2, %2 : vector<8x128xf32>
    %6 = vector.shape_cast %2 : vector<8x128xf32> to vector<1x8x128xf32>
    %c0_5 = arith.constant 0 : index
    %c0_6 = arith.constant 0 : index
    %c0_7 = arith.constant 0 : index
    %7 = vector.load %arg4[%c0_5, %c0_6, %c0_7] : memref<1x8x128xf32, #tpu.memory_space<vmem>>, vector<1x8x128xf32>
    tpu.vector_store %arg4[%c0_5, %c0_6, %c0_7], %6 {strides = array<i32>} : memref<1x8x128xf32, #tpu.memory_space<vmem>>, vector<1x8x128xf32>,
    %8 = vector.shape_cast %5 : vector<8x128xf32> to vector<1x8x128xf32>
    %c0_8 = arith.constant 0 : index
    %c0_9 = arith.constant 0 : index
    %c0_10 = arith.constant 0 : index
    %9 = vector.load %arg5[%c0_8, %c0_9, %c0_10] : memref<1x8x128xf32, #tpu.memory_space<vmem>>, vector<1x8x128xf32>
    tpu.vector_store %arg5[%c0_8, %c0_9, %c0_10], %8 {strides = array<i32>} : memref<1x8x128xf32, #tpu.memory_space<vmem>>, vector<1x8x128xf32>,
    return
  }
  func.func @transform_0(%arg0: i32) -> (i32, i32) {
    %c0_i32 = arith.constant 0 : i32
    %c0_i32_0 = arith.constant 0 : i32
    %c0_i32_1 = arith.constant 0 : i32
    return %c0_i32, %c0_i32_0 : i32, i32
  }
  func.func @transform_1(%arg0: i32) -> (i32, i32) {
    %c0_i32 = arith.constant 0 : i32
    %c0_i32_0 = arith.constant 0 : i32
    return %c0_i32, %arg0 : i32, i32
  }
  func.func @transform_2(%arg0: i32) -> (i32, i32) {
    %c0_i32 = arith.constant 0 : i32
    %c0_i32_0 = arith.constant 0 : i32
    return %c0_i32, %arg0 : i32, i32
  }
  func.func @transform_3(%arg0: i32) -> (i32, i32, i32) {
    %c0_i32 = arith.constant 0 : i32
    %c0_i32_0 = arith.constant 0 : i32
    %c0_i32_1 = arith.constant 0 : i32
    return %arg0, %c0_i32, %c0_i32_0 : i32, i32, i32
  }
  func.func @transform_4(%arg0: i32) -> (i32, i32, i32) {
    %c0_i32 = arith.constant 0 : i32
    %c0_i32_0 = arith.constant 0 : i32
    %c0_i32_1 = arith.constant 0 : i32
    return %arg0, %c0_i32, %c0_i32_0 : i32, i32, i32
  }
}

module attributes {stable_mosaic.version = 11 : i64} {
  func.func @_bn_res_relu_kernel(%arg0: i32, %arg1: memref<8x128xbf16, #tpu.memory_space<vmem>>, %arg2: memref<8x1xf32, #tpu.memory_space<vmem>>, %arg3: memref<8x1xf32, #tpu.memory_space<vmem>>, %arg4: memref<8x128xbf16, #tpu.memory_space<vmem>>, %arg5: memref<8x128xbf16, #tpu.memory_space<vmem>>) attributes {dimension_semantics = [#tpu.dimension_semantics<parallel>], iteration_bounds = array<i64: 1>, scalar_prefetch = 0 : i64, scratch_operands = 0 : i64, tpu.core_type = #tpu.core_type<tc>, window_params = [{transform_indices = @transform_0, window_bounds = array<i64: 8, 128>}, {pipeline_mode = #tpu.pipeline_mode<synchronous>, transform_indices = @transform_1, window_bounds = array<i64: 8, 1>}, {pipeline_mode = #tpu.pipeline_mode<synchronous>, transform_indices = @transform_2, window_bounds = array<i64: 8, 1>}, {transform_indices = @transform_3, window_bounds = array<i64: 8, 128>}, {transform_indices = @transform_4, window_bounds = array<i64: 8, 128>}]} {
    %c0 = arith.constant 0 : index
    %c0_0 = arith.constant 0 : index
    %0 = vector.load %arg1[%c0, %c0_0] : memref<8x128xbf16, #tpu.memory_space<vmem>>, vector<8x128xbf16>
    %1 = arith.extf %0 : vector<8x128xbf16> to vector<8x128xf32>
    %c0_1 = arith.constant 0 : index
    %c0_2 = arith.constant 0 : index
    %2 = vector.load %arg2[%c0_1, %c0_2] : memref<8x1xf32, #tpu.memory_space<vmem>>, vector<8x1xf32>
    %3 = vector.broadcast %2 : vector<8x1xf32> to vector<8x128xf32>
    %4 = arith.mulf %1, %3 : vector<8x128xf32>
    %c0_3 = arith.constant 0 : index
    %c0_4 = arith.constant 0 : index
    %5 = vector.load %arg3[%c0_3, %c0_4] : memref<8x1xf32, #tpu.memory_space<vmem>>, vector<8x1xf32>
    %6 = vector.broadcast %5 : vector<8x1xf32> to vector<8x128xf32>
    %7 = arith.addf %4, %6 : vector<8x128xf32>
    %c0_5 = arith.constant 0 : index
    %c0_6 = arith.constant 0 : index
    %8 = vector.load %arg4[%c0_5, %c0_6] : memref<8x128xbf16, #tpu.memory_space<vmem>>, vector<8x128xbf16>
    %9 = arith.extf %8 : vector<8x128xbf16> to vector<8x128xf32>
    %10 = arith.addf %7, %9 : vector<8x128xf32>
    %cst = arith.constant 0.000000e+00 : f32
    %11 = vector.broadcast %cst : f32 to vector<8x128xf32>
    %12 = arith.maximumf %10, %11 : vector<8x128xf32>
    %13 = arith.truncf %12 : vector<8x128xf32> to vector<8x128xbf16>
    %c0_7 = arith.constant 0 : index
    %c0_8 = arith.constant 0 : index
    %14 = vector.load %arg5[%c0_7, %c0_8] : memref<8x128xbf16, #tpu.memory_space<vmem>>, vector<8x128xbf16>
    tpu.vector_store %arg5[%c0_7, %c0_8], %13 {strides = array<i32>} : memref<8x128xbf16, #tpu.memory_space<vmem>>, vector<8x128xbf16>,
    return
  }
  func.func @transform_0(%arg0: i32) -> (i32, i32) {
    %c0_i32 = arith.constant 0 : i32
    %c0_i32_0 = arith.constant 0 : i32
    return %c0_i32, %arg0 : i32, i32
  }
  func.func @transform_1(%arg0: i32) -> (i32, i32) {
    %c0_i32 = arith.constant 0 : i32
    %c0_i32_0 = arith.constant 0 : i32
    %c0_i32_1 = arith.constant 0 : i32
    return %c0_i32, %c0_i32_0 : i32, i32
  }
  func.func @transform_2(%arg0: i32) -> (i32, i32) {
    %c0_i32 = arith.constant 0 : i32
    %c0_i32_0 = arith.constant 0 : i32
    %c0_i32_1 = arith.constant 0 : i32
    return %c0_i32, %c0_i32_0 : i32, i32
  }
  func.func @transform_3(%arg0: i32) -> (i32, i32) {
    %c0_i32 = arith.constant 0 : i32
    %c0_i32_0 = arith.constant 0 : i32
    return %c0_i32, %arg0 : i32, i32
  }
  func.func @transform_4(%arg0: i32) -> (i32, i32) {
    %c0_i32 = arith.constant 0 : i32
    %c0_i32_0 = arith.constant 0 : i32
    return %c0_i32, %arg0 : i32, i32
  }
}

</mosaic_0001>

<llo_original>
// kernel: res_basic_block.5
$region0: #{res_basic_block.5}
  #allocation0 [shape = 'u32[]', space=smem, size = 0x4, offset = 0x4, fixed_abs, tag = 'smem constant byte address 0x4 - core index']
  #allocation1 [shape = 'u32[72,128]{1,0:T(1,128)}', space=vmem, size = 0x9000, scoped, tag = 'internal scratch']
  %s0 = inlined_call_operand.vmem [shape: bf16[8,128], index: 0, kind: input, shape index: {}, may-alias: {0,3}]
  %s1 = inlined_call_operand.vmem [shape: f32[8,1], index: 1, kind: input, shape index: {}]
  %s2 = inlined_call_operand.vmem [shape: f32[8,1], index: 2, kind: input, shape index: {}]
  %s3 = inlined_call_operand.vmem [shape: bf16[8,128], index: 3, kind: output, shape index: {}, may-alias: {0,3}]
  %s4 = sld [smem:[#allocation0]]
  $region22: #{res_basic_block.5} parent=0
    _
  %s6 = ssub.s32 1, %s4
  %s7 = scalar_select 0, %s6, %s4
  // Predicated region
  $region2: #{res_basic_block.5} parent=0 // pred_check
    _
  $region3: #{res_basic_block.5} parent=0 // pred_check_branch
    %9 = sbr.rel (0) target = $region5
  $region4: #{res_basic_block.5} parent=0 // pred_region
    _
  $region5: #{res_basic_block.5} parent=0 // pred_fallthru
    _
  // Predicated region
  $region6: #{res_basic_block.5} parent=0 // pred_check
    _
  $region7: #{res_basic_block.5} parent=0 // pred_check_branch
    %11 = sbr.rel (0) target = $region9
  $region8: #{res_basic_block.5} parent=0 // pred_region
    _
  $region9: #{res_basic_block.5} parent=0 // pred_fallthru
    _
  // Predicated region
  $region10: #{res_basic_block.5} parent=0 // pred_check
    _
  $region11: #{res_basic_block.5} parent=0 // pred_check_branch
    %13 = sbr.rel (0) target = $region13
  $region12: #{res_basic_block.5} parent=0 // pred_region
    _
  $region13: #{res_basic_block.5} parent=0 // pred_fallthru
    _
  %v14 = vld [vmem:[%s0] sm:$0xf]
  %v15 = vunpack.c.l.bf16 %v14
  %v16 = vld [vmem:[%s1] sm:$0xff]
  %18 = vset.pattern.permute.xlu0 0
  %19 = vperm.xlu0 %18, %v16
  %v20 = vpop.permute.xlu0 %19
  %v22 = vmul.f32 %v15, %v20
  %v23 = vld [vmem:[%s2] sm:$0xff]
  %25 = vset.pattern.permute.xlu0 0
  %26 = vperm.xlu0 %25, %v23
  %v27 = vpop.permute.xlu0 %26
  %v29 = vadd.f32 %v22, %v27
  %v30 = vmax.f32 %v29, 0.0
  %v31 = vpack.c.bf16 %v30, %v30
  %32 = vst [vmem:[%s3] sm:$0xf] %v31
  // Predicated region
  $region14: #{res_basic_block.5} parent=0 // pred_check
    _
  $region15: #{res_basic_block.5} parent=0 // pred_check_branch
    %34 = sbr.rel (0) target = $region17
  $region16: #{res_basic_block.5} parent=0 // pred_region
    _
  $region17: #{res_basic_block.5} parent=0 // pred_fallthru
    _
  // Predicated region
  $region18: #{res_basic_block.5} parent=0 // pred_check
    _
  $region19: #{res_basic_block.5} parent=0 // pred_check_branch
    %36 = sbr.rel (0) target = $region21
  $region20: #{res_basic_block.5} parent=0 // pred_region
    _
  $region21: #{res_basic_block.5} parent=0 // pred_fallthru
    _

// kernel: res_basic_block.4
$region0: #{res_basic_block.4}
  #allocation0 [shape = 'u32[]', space=smem, size = 0x4, offset = 0x4, fixed_abs, tag = 'smem constant byte address 0x4 - core index']
  #allocation1 [shape = 'u32[72,128]{1,0:T(1,128)}', space=vmem, size = 0x9000, scoped, tag = 'internal scratch']
  %s0 = inlined_call_operand.vmem [shape: bf16[8,48], index: 0, kind: input, shape index: {}]
  %s1 = inlined_call_operand.vmem [shape: bf16[48,128], index: 1, kind: input, shape index: {}]
  %s2 = inlined_call_operand.vmem [shape: bf16[8,128], index: 2, kind: output, shape index: {0}]
  %s3 = inlined_call_operand.vmem [shape: f32[1,8,128], index: 3, kind: output, shape index: {1}]
  %s4 = inlined_call_operand.vmem [shape: f32[1,8,128], index: 4, kind: output, shape index: {2}]
  %5 = xla_tuple %s2, %s3, %s4
  %s6 = sld [smem:[#allocation0]]
  $region34: #{res_basic_block.4} parent=0
    _
  %s8 = ssub.s32 1, %s6
  %s9 = scalar_select 0, %s8, %s6
  // Predicated region
  $region2: #{res_basic_block.4} parent=0 // pred_check
    _
  $region3: #{res_basic_block.4} parent=0 // pred_check_branch
    %11 = sbr.rel (0) target = $region5
  $region4: #{res_basic_block.4} parent=0 // pred_region
    _
  $region5: #{res_basic_block.4} parent=0 // pred_fallthru
    _
  // Predicated region
  $region6: #{res_basic_block.4} parent=0 // pred_check
    _
  $region7: #{res_basic_block.4} parent=0 // pred_check_branch
    %13 = sbr.rel (0) target = $region9
  $region8: #{res_basic_block.4} parent=0 // pred_region
    _
  $region9: #{res_basic_block.4} parent=0 // pred_fallthru
    _
  %v15 = vld [vmem:[%s0] sm:$0xf]
  %v16 = vld [vmem:[%s1] sm:$0xf]
  %v17 = vld [vmem:[%s1 + $0x4] sm:$0xf]
  %v18 = vld [vmem:[%s1 + $0x8] sm:$0xf]
  %v19 = vld [vmem:[%s1 + $0xc] sm:$0xf]
  %v20 = vld [vmem:[%s1 + $0x10] sm:$0xf]
  %v21 = vld [vmem:[%s1 + $0x14] sm:$0xf]
  %v28 = vunpack.c.l.b16 %v16
  %v29 = vunpack.c.l.b16 %v17
  %v30 = vunpack.c.l.b16 %v18
  %v31 = vunpack.c.l.b16 %v19
  %v32 = vunpack.c.l.b16 %v20
  %v33 = vunpack.c.l.b16 %v21
  %v34 = vpack.c.b16 %v29, %v28
  %v35 = vpack.c.b16 %v31, %v30
  %v36 = vpack.c.b16 %v33, %v32
  %vm40 = vcmask 392192
  %v42 = vsel %vm40, %v15, 0
  %44 = vmatpush.bf16.msra.mxu0 0
  %45 = vmatpush.bf16.msra.mxu0 0
  %46 = vmatpush.bf16.msra.mxu0 0
  %47 = vmatpush.bf16.msra.mxu0 0
  %48 = vmatpush.bf16.msra.mxu0 0
  %49 = vmatpush.bf16.msra.mxu0 %v36
  %50 = vmatpush.bf16.msra.mxu0 %v35
  %51 = vmatpush.bf16.msra.mxu0 %v34
  %52 = vmatmul.bf16.gmra.mxu0 %v42
  %v53 = vpop.f32.mrf.mxu0
  %v54 = vadd.f32 0.0, %v53
  %v55 = vpop.f32.mrf.mxu0
  %56 = vdwg.mxu0
  %v57 = vpack.c.bf16 %v54, %v54
  %58 = vst [vmem:[%s2] sm:$0xf] %v57
  %v59 = vmul.f32 %v54, %v54
  %60 = vst [vmem:[%s3] sm:$0xff] %v54
  %61 = vst [vmem:[%s4] sm:$0xff] %v59
  // Predicated region
  $region10: #{res_basic_block.4} parent=0 // pred_check
    _
  $region11: #{res_basic_block.4} parent=0 // pred_check_branch
    %63 = sbr.rel (0) target = $region13
  $region12: #{res_basic_block.4} parent=0 // pred_region
    _
  $region13: #{res_basic_block.4} parent=0 // pred_fallthru
    _
  // Predicated region
  $region14: #{res_basic_block.4} parent=0 // pred_check
    _
  $region15: #{res_basic_block.4} parent=0 // pred_check_branch
    %65 = sbr.rel (0) target = $region17
  $region16: #{res_basic_block.4} parent=0 // pred_region
    _
  $region17: #{res_basic_block.4} parent=0 // pred_fallthru
    _
  // Predicated region
  $region18: #{res_basic_block.4} parent=0 // pred_check
    _
  $region19: #{res_basic_block.4} parent=0 // pred_check_branch
    %67 = sbr.rel (0) target = $region21
  $region20: #{res_basic_block.4} parent=0 // pred_region
    _
  $region21: #{res_basic_block.4} parent=0 // pred_fallthru
    _
  // Predicated region
  $region22: #{res_basic_block.4} parent=0 // pred_check
    _
  $region23: #{res_basic_block.4} parent=0 // pred_check_branch
    %69 = sbr.rel (0) target = $region25
  $region24: #{res_basic_block.4} parent=0 // pred_region
    _
  $region25: #{res_basic_block.4} parent=0 // pred_fallthru
    _
  // Predicated region
  $region26: #{res_basic_block.4} parent=0 // pred_check
    _
  $region27: #{res_basic_block.4} parent=0 // pred_check_branch
    %71 = sbr.rel (0) target = $region29
  $region28: #{res_basic_block.4} parent=0 // pred_region
    _
  $region29: #{res_basic_block.4} parent=0 // pred_fallthru
    _
  // Predicated region
  $region30: #{res_basic_block.4} parent=0 // pred_check
    _
  $region31: #{res_basic_block.4} parent=0 // pred_check_branch
    %73 = sbr.rel (0) target = $region33
  $region32: #{res_basic_block.4} parent=0 // pred_region
    _
  $region33: #{res_basic_block.4} parent=0 // pred_fallthru
    _

// kernel: res_basic_block.6
$region0: #{res_basic_block.6}
  #allocation0 [shape = 'u32[]', space=smem, size = 0x4, offset = 0x4, fixed_abs, tag = 'smem constant byte address 0x4 - core index']
  #allocation1 [shape = 'u32[72,128]{1,0:T(1,128)}', space=vmem, size = 0x9000, scoped, tag = 'internal scratch']
  %s0 = inlined_call_operand.vmem [shape: bf16[8,80], index: 0, kind: input, shape index: {}]
  %s1 = inlined_call_operand.vmem [shape: bf16[80,128], index: 1, kind: input, shape index: {}]
  %s2 = inlined_call_operand.vmem [shape: bf16[8,128], index: 2, kind: output, shape index: {0}]
  %s3 = inlined_call_operand.vmem [shape: f32[1,8,128], index: 3, kind: output, shape index: {1}]
  %s4 = inlined_call_operand.vmem [shape: f32[1,8,128], index: 4, kind: output, shape index: {2}]
  %5 = xla_tuple %s2, %s3, %s4
  %s6 = sld [smem:[#allocation0]]
  $region34: #{res_basic_block.6} parent=0
    _
  %s8 = ssub.s32 1, %s6
  %s9 = scalar_select 0, %s8, %s6
  // Predicated region
  $region2: #{res_basic_block.6} parent=0 // pred_check
    _
  $region3: #{res_basic_block.6} parent=0 // pred_check_branch
    %11 = sbr.rel (0) target = $region5
  $region4: #{res_basic_block.6} parent=0 // pred_region
    _
  $region5: #{res_basic_block.6} parent=0 // pred_fallthru
    _
  // Predicated region
  $region6: #{res_basic_block.6} parent=0 // pred_check
    _
  $region7: #{res_basic_block.6} parent=0 // pred_check_branch
    %13 = sbr.rel (0) target = $region9
  $region8: #{res_basic_block.6} parent=0 // pred_region
    _
  $region9: #{res_basic_block.6} parent=0 // pred_fallthru
    _
  %v15 = vld [vmem:[%s0] sm:$0xf]
  %v16 = vld [vmem:[%s1] sm:$0xf]
  %v17 = vld [vmem:[%s1 + $0x4] sm:$0xf]
  %v18 = vld [vmem:[%s1 + $0x8] sm:$0xf]
  %v19 = vld [vmem:[%s1 + $0xc] sm:$0xf]
  %v20 = vld [vmem:[%s1 + $0x10] sm:$0xf]
  %v21 = vld [vmem:[%s1 + $0x14] sm:$0xf]
  %v22 = vld [vmem:[%s1 + $0x18] sm:$0xf]
  %v23 = vld [vmem:[%s1 + $0x1c] sm:$0xf]
  %v24 = vld [vmem:[%s1 + $0x20] sm:$0xf]
  %v25 = vld [vmem:[%s1 + $0x24] sm:$0xf]
  %v36 = vunpack.c.l.b16 %v16
  %v37 = vunpack.c.l.b16 %v17
  %v38 = vunpack.c.l.b16 %v18
  %v39 = vunpack.c.l.b16 %v19
  %v40 = vunpack.c.l.b16 %v20
  %v41 = vunpack.c.l.b16 %v21
  %v42 = vunpack.c.l.b16 %v22
  %v43 = vunpack.c.l.b16 %v23
  %v44 = vunpack.c.l.b16 %v24
  %v45 = vunpack.c.l.b16 %v25
  %v46 = vpack.c.b16 %v37, %v36
  %v47 = vpack.c.b16 %v39, %v38
  %v48 = vpack.c.b16 %v41, %v40
  %v49 = vpack.c.b16 %v43, %v42
  %v50 = vpack.c.b16 %v45, %v44
  %vm56 = vcmask 654336
  %v58 = vsel %vm56, %v15, 0
  %60 = vmatpush.bf16.msra.mxu0 0
  %61 = vmatpush.bf16.msra.mxu0 0
  %62 = vmatpush.bf16.msra.mxu0 0
  %63 = vmatpush.bf16.msra.mxu0 %v50
  %64 = vmatpush.bf16.msra.mxu0 %v49
  %65 = vmatpush.bf16.msra.mxu0 %v48
  %66 = vmatpush.bf16.msra.mxu0 %v47
  %67 = vmatpush.bf16.msra.mxu0 %v46
  %68 = vmatmul.bf16.gmra.mxu0 %v58
  %v69 = vpop.f32.mrf.mxu0
  %v70 = vadd.f32 0.0, %v69
  %v71 = vpop.f32.mrf.mxu0
  %72 = vdwg.mxu0
  %v73 = vpack.c.bf16 %v70, %v70
  %74 = vst [vmem:[%s2] sm:$0xf] %v73
  %v75 = vmul.f32 %v70, %v70
  %76 = vst [vmem:[%s3] sm:$0xff] %v70
  %77 = vst [vmem:[%s4] sm:$0xff] %v75
  // Predicated region
  $region10: #{res_basic_block.6} parent=0 // pred_check
    _
  $region11: #{res_basic_block.6} parent=0 // pred_check_branch
    %79 = sbr.rel (0) target = $region13
  $region12: #{res_basic_block.6} parent=0 // pred_region
    _
  $region13: #{res_basic_block.6} parent=0 // pred_fallthru
    _
  // Predicated region
  $region14: #{res_basic_block.6} parent=0 // pred_check
    _
  $region15: #{res_basic_block.6} parent=0 // pred_check_branch
    %81 = sbr.rel (0) target = $region17
  $region16: #{res_basic_block.6} parent=0 // pred_region
    _
  $region17: #{res_basic_block.6} parent=0 // pred_fallthru
    _
  // Predicated region
  $region18: #{res_basic_block.6} parent=0 // pred_check
    _
  $region19: #{res_basic_block.6} parent=0 // pred_check_branch
    %83 = sbr.rel (0) target = $region21
  $region20: #{res_basic_block.6} parent=0 // pred_region
    _
  $region21: #{res_basic_block.6} parent=0 // pred_fallthru
    _
  // Predicated region
  $region22: #{res_basic_block.6} parent=0 // pred_check
    _
  $region23: #{res_basic_block.6} parent=0 // pred_check_branch
    %85 = sbr.rel (0) target = $region25
  $region24: #{res_basic_block.6} parent=0 // pred_region
    _
  $region25: #{res_basic_block.6} parent=0 // pred_fallthru
    _
  // Predicated region
  $region26: #{res_basic_block.6} parent=0 // pred_check
    _
  $region27: #{res_basic_block.6} parent=0 // pred_check_branch
    %87 = sbr.rel (0) target = $region29
  $region28: #{res_basic_block.6} parent=0 // pred_region
    _
  $region29: #{res_basic_block.6} parent=0 // pred_fallthru
    _
  // Predicated region
  $region30: #{res_basic_block.6} parent=0 // pred_check
    _
  $region31: #{res_basic_block.6} parent=0 // pred_check_branch
    %89 = sbr.rel (0) target = $region33
  $region32: #{res_basic_block.6} parent=0 // pred_region
    _
  $region33: #{res_basic_block.6} parent=0 // pred_fallthru
    _

// kernel: res_basic_block.7
$region0: #{res_basic_block.7}
  #allocation0 [shape = 'u32[]', space=smem, size = 0x4, offset = 0x4, fixed_abs, tag = 'smem constant byte address 0x4 - core index']
  #allocation1 [shape = 'u32[72,128]{1,0:T(1,128)}', space=vmem, size = 0x9000, scoped, tag = 'internal scratch']
  %s0 = inlined_call_operand.vmem [shape: bf16[8,128], index: 0, kind: input, shape index: {}, may-alias: {0,4}]
  %s1 = inlined_call_operand.vmem [shape: f32[8,1], index: 1, kind: input, shape index: {}]
  %s2 = inlined_call_operand.vmem [shape: f32[8,1], index: 2, kind: input, shape index: {}]
  %s3 = inlined_call_operand.vmem [shape: bf16[8,128], index: 3, kind: input, shape index: {}]
  %s4 = inlined_call_operand.vmem [shape: bf16[8,128], index: 4, kind: output, shape index: {}, may-alias: {0,4}]
  %s5 = sld [smem:[#allocation0]]
  $region26: #{res_basic_block.7} parent=0
    _
  %s7 = ssub.s32 1, %s5
  %s8 = scalar_select 0, %s7, %s5
  // Predicated region
  $region2: #{res_basic_block.7} parent=0 // pred_check
    _
  $region3: #{res_basic_block.7} parent=0 // pred_check_branch
    %10 = sbr.rel (0) target = $region5
  $region4: #{res_basic_block.7} parent=0 // pred_region
    _
  $region5: #{res_basic_block.7} parent=0 // pred_fallthru
    _
  // Predicated region
  $region6: #{res_basic_block.7} parent=0 // pred_check
    _
  $region7: #{res_basic_block.7} parent=0 // pred_check_branch
    %12 = sbr.rel (0) target = $region9
  $region8: #{res_basic_block.7} parent=0 // pred_region
    _
  $region9: #{res_basic_block.7} parent=0 // pred_fallthru
    _
  // Predicated region
  $region10: #{res_basic_block.7} parent=0 // pred_check
    _
  $region11: #{res_basic_block.7} parent=0 // pred_check_branch
    %14 = sbr.rel (0) target = $region13
  $region12: #{res_basic_block.7} parent=0 // pred_region
    _
  $region13: #{res_basic_block.7} parent=0 // pred_fallthru
    _
  // Predicated region
  $region14: #{res_basic_block.7} parent=0 // pred_check
    _
  $region15: #{res_basic_block.7} parent=0 // pred_check_branch
    %16 = sbr.rel (0) target = $region17
  $region16: #{res_basic_block.7} parent=0 // pred_region
    _
  $region17: #{res_basic_block.7} parent=0 // pred_fallthru
    _
  %v17 = vld [vmem:[%s0] sm:$0xf]
  %v18 = vunpack.c.l.bf16 %v17
  %v19 = vld [vmem:[%s1] sm:$0xff]
  %21 = vset.pattern.permute.xlu0 0
  %22 = vperm.xlu0 %21, %v19
  %v23 = vpop.permute.xlu0 %22
  %v25 = vmul.f32 %v18, %v23
  %v26 = vld [vmem:[%s2] sm:$0xff]
  %28 = vset.pattern.permute.xlu0 0
  %29 = vperm.xlu0 %28, %v26
  %v30 = vpop.permute.xlu0 %29
  %v32 = vadd.f32 %v25, %v30
  %v33 = vld [vmem:[%s3] sm:$0xf]
  %v34 = vunpack.c.l.bf16 %v33
  %v35 = vadd.f32 %v32, %v34
  %v36 = vmax.f32 %v35, 0.0
  %v37 = vpack.c.bf16 %v36, %v36
  %38 = vst [vmem:[%s4] sm:$0xf] %v37
  // Predicated region
  $region18: #{res_basic_block.7} parent=0 // pred_check
    _
  $region19: #{res_basic_block.7} parent=0 // pred_check_branch
    %40 = sbr.rel (0) target = $region21
  $region20: #{res_basic_block.7} parent=0 // pred_region
    _
  $region21: #{res_basic_block.7} parent=0 // pred_fallthru
    _
  // Predicated region
  $region22: #{res_basic_block.7} parent=0 // pred_check
    _
  $region23: #{res_basic_block.7} parent=0 // pred_check_branch
    %42 = sbr.rel (0) target = $region25
  $region24: #{res_basic_block.7} parent=0 // pred_region
    _
  $region25: #{res_basic_block.7} parent=0 // pred_fallthru
    _

</llo_original>
